<compile_context>
chip_gen: v7x
topology: tpu7x:2x2x1
jax: 0.10.0
libtpu: 0.0.40
codegen_flags: <defaults>
</compile_context>

<pallas_src>
import functools
import math

import jax
import jax.numpy as jnp
from jax.experimental import pallas as pl
from jax.experimental.pallas import tpu as pltpu


def _gumbel_softmax_kernel(x_ref, u_ref, o_ref, *, inv_temp):
    x = x_ref[...].astype(jnp.float32)
    u = u_ref[...].astype(jnp.float32)

    # log_softmax along the last (lane) axis.
    m1 = jnp.max(x, axis=-1, keepdims=True)
    z = x - m1
    lse = jnp.log(jnp.sum(jnp.exp(z), axis=-1, keepdims=True))
    ls = z - lse

    # Gumbel noise + temperature scaling.
    g = -jnp.log(-jnp.log(u))
    b = (ls + g) * jnp.float32(inv_temp)

    # Numerically stable softmax along the last axis.
    m2 = jnp.max(b, axis=-1, keepdims=True)
    e = jnp.exp(b - m2)
    denom = jnp.sum(e, axis=-1, keepdims=True)
    o_ref[...] = (e / denom).astype(o_ref.dtype)


def gumbel_softmax_sample(x, u, temperature):
    """Fused log_softmax + Gumbel-softmax over the last axis via Pallas."""
    orig_shape = x.shape
    orig_dtype = x.dtype
    V = orig_shape[-1]
    R = 1
    for d in orig_shape[:-1]:
        R *= d

    x2d = x.reshape(R, V).astype(jnp.float32)
    u2d = u.reshape(R, V).astype(jnp.float32)

    # Row tile: big (fewer grid steps / less per-step overhead), 8-aligned,
    # capped so one f32 block stays around 2 MiB.
    SUB = 8
    BYTES_PER_BLOCK = 2 * 1024 * 1024
    r8 = -(-R // SUB) * SUB
    tr_cap = max(SUB, (BYTES_PER_BLOCK // (4 * V)) // SUB * SUB)
    TR = min(r8, tr_cap)
    R_pad = -(-R // TR) * TR

    if R_pad != R:
        # Pad x with 0 and u with 0.5 so padded rows stay finite (dropped later).
        x2d = jnp.pad(x2d, ((0, R_pad - R), (0, 0)))
        u2d = jnp.pad(u2d, ((0, R_pad - R), (0, 0)), constant_values=0.5)

    grid = (R_pad // TR,)
    inv_temp = 1.0 / float(temperature)

    out2d = pl.pallas_call(
        functools.partial(_gumbel_softmax_kernel, inv_temp=inv_temp),
        out_shape=jax.ShapeDtypeStruct((R_pad, V), jnp.float32),
        grid=grid,
        in_specs=[
            pl.BlockSpec((TR, V), lambda i: (i, 0)),
            pl.BlockSpec((TR, V), lambda i: (i, 0)),
        ],
        out_specs=pl.BlockSpec((TR, V), lambda i: (i, 0)),
        compiler_params=pltpu.CompilerParams(
            dimension_semantics=("parallel",),
        ),
    )(x2d, u2d)

    if R_pad != R:
        out2d = out2d[:R]
    return out2d.reshape(orig_shape).astype(orig_dtype)


def softmax_sample(x, key, temperature=math.exp(-5)):
    """Equivalent of Softmax_Sample.forward(datax)."""
    u = jax.random.uniform(
        key, x.shape, dtype=jnp.float32,
        minval=jnp.finfo(jnp.float32).tiny, maxval=1.0)
    return gumbel_softmax_sample(x, u, temperature)


def _reference(x, u, temperature):
    x = x.astype(jnp.float32)
    ls = x - jax.scipy.special.logsumexp(x, axis=-1, keepdims=True)
    g = -jnp.log(-jnp.log(u))
    b = (ls + g) / temperature
    b = b - jnp.max(b, axis=-1, keepdims=True)
    e = jnp.exp(b)
    return e / jnp.sum(e, axis=-1, keepdims=True)


if __name__ == "__main__":
    key = jax.random.PRNGKey(0)
    kx, ku = jax.random.split(key)

    # (batch=2, seq=8, hidden=32) — softmax over the last axis.
    x = jax.random.normal(kx, (2, 8, 32), dtype=jnp.float32)
    temperature = math.exp(-5)

    u = jax.random.uniform(
        ku, x.shape, dtype=jnp.float32,
        minval=jnp.finfo(jnp.float32).tiny, maxval=1.0)

    y = gumbel_softmax_sample(x, u, temperature)
    y = jax.block_until_ready(y)

    assert y.shape == x.shape and y.dtype == x.dtype

    # Rows are valid probability distributions.
    row_sums = jnp.sum(y, axis=-1)
    assert bool(jnp.all(jnp.abs(row_sums - 1.0) < 1e-3)), "row sums off"
    assert bool(jnp.all(y >= 0.0)), "negative probabilities"

    # Match the pure-JAX reference on identical uniforms.
    y_ref = _reference(x, u, temperature)
    assert bool(jnp.all(jnp.abs(y - y_ref) < 1e-3)), "mismatch vs reference"

    print("KERNEL_OK")
</pallas_src>

<mosaic_0001>
module attributes {stable_mosaic.version = 11 : i64} {
  func.func @_gumbel_softmax_kernel(%arg0: i32, %arg1: memref<16x32xf32, #tpu.memory_space<vmem>>, %arg2: memref<16x32xf32, #tpu.memory_space<vmem>>, %arg3: memref<16x32xf32, #tpu.memory_space<vmem>>) attributes {dimension_semantics = [#tpu.dimension_semantics<parallel>], iteration_bounds = array<i64: 1>, scalar_prefetch = 0 : i64, scratch_operands = 0 : i64, tpu.core_type = #tpu.core_type<tc>, window_params = [{transform_indices = @transform_0, window_bounds = array<i64: 16, 32>}, {transform_indices = @transform_1, window_bounds = array<i64: 16, 32>}, {transform_indices = @transform_2, window_bounds = array<i64: 16, 32>}]} {
    %c0 = arith.constant 0 : index
    %c0_0 = arith.constant 0 : index
    %0 = vector.load %arg1[%c0, %c0_0] : memref<16x32xf32, #tpu.memory_space<vmem>>, vector<16x32xf32>
    %c0_1 = arith.constant 0 : index
    %c0_2 = arith.constant 0 : index
    %1 = vector.load %arg2[%c0_1, %c0_2] : memref<16x32xf32, #tpu.memory_space<vmem>>, vector<16x32xf32>
    %cst = arith.constant dense<0xFF800000> : vector<16xf32>
    %2 = vector.multi_reduction <maximumf>, %0, %cst [1] : vector<16x32xf32> to vector<16xf32>
    %3 = vector.shape_cast %2 : vector<16xf32> to vector<16x1xf32>
    %4 = vector.broadcast %3 : vector<16x1xf32> to vector<16x32xf32>
    %5 = arith.subf %0, %4 : vector<16x32xf32>
    %6 = math.exp %5 : vector<16x32xf32>
    %cst_3 = arith.constant dense<0.000000e+00> : vector<16xf32>
    %7 = vector.multi_reduction <add>, %6, %cst_3 [1] : vector<16x32xf32> to vector<16xf32>
    %8 = vector.shape_cast %7 : vector<16xf32> to vector<16x1xf32>
    %9 = math.log %8 : vector<16x1xf32>
    %10 = vector.broadcast %9 : vector<16x1xf32> to vector<16x32xf32>
    %11 = arith.subf %5, %10 : vector<16x32xf32>
    %12 = math.log %1 : vector<16x32xf32>
    %cst_4 = arith.constant 0.000000e+00 : f32
    %13 = vector.broadcast %cst_4 : f32 to vector<16x32xf32>
    %14 = arith.subf %13, %12 : vector<16x32xf32>
    %15 = math.log %14 : vector<16x32xf32>
    %cst_5 = arith.constant 0.000000e+00 : f32
    %16 = vector.broadcast %cst_5 : f32 to vector<16x32xf32>
    %17 = arith.subf %16, %15 : vector<16x32xf32>
    %18 = arith.addf %11, %17 : vector<16x32xf32>
    %cst_6 = arith.constant 148.413162 : f32
    %19 = vector.broadcast %cst_6 : f32 to vector<16x32xf32>
    %20 = arith.mulf %18, %19 : vector<16x32xf32>
    %cst_7 = arith.constant dense<0xFF800000> : vector<16xf32>
    %21 = vector.multi_reduction <maximumf>, %20, %cst_7 [1] : vector<16x32xf32> to vector<16xf32>
    %22 = vector.shape_cast %21 : vector<16xf32> to vector<16x1xf32>
    %23 = vector.broadcast %22 : vector<16x1xf32> to vector<16x32xf32>
    %24 = arith.subf %20, %23 : vector<16x32xf32>
    %25 = math.exp %24 : vector<16x32xf32>
    %cst_8 = arith.constant dense<0.000000e+00> : vector<16xf32>
    %26 = vector.multi_reduction <add>, %25, %cst_8 [1] : vector<16x32xf32> to vector<16xf32>
    %27 = vector.shape_cast %26 : vector<16xf32> to vector<16x1xf32>
    %28 = vector.broadcast %27 : vector<16x1xf32> to vector<16x32xf32>
    %29 = arith.divf %25, %28 : vector<16x32xf32>
    %c0_9 = arith.constant 0 : index
    %c0_10 = arith.constant 0 : index
    %30 = vector.load %arg3[%c0_9, %c0_10] : memref<16x32xf32, #tpu.memory_space<vmem>>, vector<16x32xf32>
    tpu.vector_store %arg3[%c0_9, %c0_10], %29 {strides = array<i32>} : memref<16x32xf32, #tpu.memory_space<vmem>>, vector<16x32xf32>,
    return
  }
  func.func @transform_0(%arg0: i32) -> (i32, i32) {
    %c0_i32 = arith.constant 0 : i32
    %c0_i32_0 = arith.constant 0 : i32
    return %arg0, %c0_i32 : i32, i32
  }
  func.func @transform_1(%arg0: i32) -> (i32, i32) {
    %c0_i32 = arith.constant 0 : i32
    %c0_i32_0 = arith.constant 0 : i32
    return %arg0, %c0_i32 : i32, i32
  }
  func.func @transform_2(%arg0: i32) -> (i32, i32) {
    %c0_i32 = arith.constant 0 : i32
    %c0_i32_0 = arith.constant 0 : i32
    return %arg0, %c0_i32 : i32, i32
  }
}

</mosaic_0001>

<llo_original>
// kernel: tpu_custom_call.1
$region0: #{tpu_custom_call.1}
  #allocation0 [shape = 'u32[]', space=smem, size = 0x4, offset = 0x4, fixed_abs, tag = 'smem constant byte address 0x4 - core index']
  #allocation1 [shape = 'u32[144,128]{1,0:T(1,128)}', space=vmem, size = 0x12000, scoped, tag = 'internal scratch']
  %s0 = inlined_call_operand.hbm [shape: f32[16,32], index: 0, kind: input, shape index: {}]
  %s1 = inlined_call_operand.hbm [shape: f32[16,32], index: 1, kind: input, shape index: {}]
  %s2 = inlined_call_operand.hbm [shape: f32[16,32], index: 2, kind: output, shape index: {}]
  %s3 = sld [smem:[#allocation0]]
  $region26: #{tpu_custom_call.1} parent=0
    _
  %s5 = ssub.s32 1, %s3
  %s6 = scalar_select 0, %s5, %s3
  $region1: #{tpu_custom_call.1} parent=0
    #allocation2 [shape = 'u8[8192]{0}', space=vmem, size = 0x2000, scoped, tag = 'input window, operand 0, single buffered']
    #allocation3 [shape = 's32[1]{0}', space=sflag, size = 0x4, scoped, tag = 'scoped memory for tpu_custom_call.1']
    #allocation4 [shape = 's32[1]{0}', space=sflag, size = 0x4, scoped, tag = 'scoped memory for tpu_custom_call.1']
    #allocation5 [shape = 'u8[8192]{0}', space=vmem, size = 0x2000, scoped, tag = 'input window, operand 1, single buffered']
    #allocation6 [shape = 's32[1]{0}', space=sflag, size = 0x4, scoped, tag = 'scoped memory for tpu_custom_call.1']
    #allocation7 [shape = 'u8[8192]{0}', space=vmem, size = 0x2000, scoped, tag = 'output window, operand 0, single buffered']
    %7 = vsyncpa [#allocation3], 0
    %8 = vsyncpa [#allocation6], 0
    %9 = vsyncpa [#allocation4], 0
    // Predicated region
    $region2: #{tpu_custom_call.1} parent=1 // pred_check
      _
    $region3: #{tpu_custom_call.1} parent=1 // pred_check_branch
      %11 = sbr.rel (0) target = $region5
    $region4: #{tpu_custom_call.1} parent=1 // pred_region
      %s13 = ssub.s32 256, 256
      %14 = vsyncadd [#allocation3], %s13
      %s15 = sshll.u32 [#allocation2], 4
      %s16 = int_to_ptr.vmem [resolvable:$true] %s15
      %21 = dma.hbm_to_vmem [thread:$0]  %s0, 256, %s16, [#allocation3], 128, 128, 8
    $region5: #{tpu_custom_call.1} parent=1 // pred_fallthru
      _
    // Predicated region
    $region6: #{tpu_custom_call.1} parent=1 // pred_check
      _
    $region7: #{tpu_custom_call.1} parent=1 // pred_check_branch
      %23 = sbr.rel (0) target = $region9
    $region8: #{tpu_custom_call.1} parent=1 // pred_region
      %s25 = ssub.s32 256, 256
      %26 = vsyncadd [#allocation6], %s25
      %s27 = sshll.u32 [#allocation5], 4
      %s28 = int_to_ptr.vmem [resolvable:$true] %s27
      %33 = dma.hbm_to_vmem [thread:$0]  %s1, 256, %s28, [#allocation6], 128, 128, 8
    $region9: #{tpu_custom_call.1} parent=1 // pred_fallthru
      _
    // Predicated region
    $region10: #{tpu_custom_call.1} parent=1 // pred_check
      _
    $region11: #{tpu_custom_call.1} parent=1 // pred_check_branch
      %35 = sbr.rel (0) target = $region13
    $region12: #{tpu_custom_call.1} parent=1 // pred_region
      %36 = dma.done [#allocation3], 256
    $region13: #{tpu_custom_call.1} parent=1 // pred_fallthru
      _
    // Predicated region
    $region14: #{tpu_custom_call.1} parent=1 // pred_check
      _
    $region15: #{tpu_custom_call.1} parent=1 // pred_check_branch
      %38 = sbr.rel (0) target = $region17
    $region16: #{tpu_custom_call.1} parent=1 // pred_region
      %39 = dma.done [#allocation6], 256
    $region17: #{tpu_custom_call.1} parent=1 // pred_fallthru
      _
    %v40 = vld [vmem:[#allocation2] sm:$0xff]
    %v41 = vld [vmem:[#allocation2 + $0x8] sm:$0xff]
    %v42 = vld [vmem:[#allocation5] sm:$0xff]
    %v43 = vld [vmem:[#allocation5 + $0x8] sm:$0xff]
    %vm44 = vcmask 261120
    %v45 = vsel %vm44, %v40, -inf
    %46 = vmax.xlane.f32.xlu0 %v45
    %v47 = vpop.xlane.xlu0 %46
    %v48 = vsel %vm44, %v41, -inf
    %49 = vmax.xlane.f32.xlu0 %v48
    %v50 = vpop.xlane.xlu0 %49
    %v51 = vsub.f32 %v40, %v47
    %v52 = vsub.f32 %v41, %v50
    %v53 = vmul.f32 %v51, 1.442695
    %v54 = vpow.pop %v53
    %v55 = vmul.f32 %v52, 1.442695
    %v56 = vpow.pop %v55
    %v57 = vsel %vm44, %v54, 0.0
    %58 = vadd.xlane.f32.xlu0 %v57
    %v59 = vpop.xlane.xlu0 %58
    %v60 = vsel %vm44, %v56, 0.0
    %61 = vadd.xlane.f32.xlu0 %v60
    %v62 = vpop.xlane.xlu0 %61
    %v63 = vlog2.pop %v59
    %v64 = vmul.f32 %v63, 0.6931472
    %v65 = vlog2.pop %v62
    %v66 = vmul.f32 %v65, 0.6931472
    %v67 = vsub.f32 %v51, %v64
    %v68 = vsub.f32 %v52, %v66
    %v69 = vlog2.pop %v42
    %v70 = vmul.f32 %v69, 0.6931472
    %v71 = vlog2.pop %v43
    %v72 = vmul.f32 %v71, 0.6931472
    %v73 = vsub.f32 0.0, %v70
    %v74 = vsub.f32 0.0, %v72
    %v75 = vlog2.pop %v73
    %v76 = vmul.f32 %v75, 0.6931472
    %v77 = vlog2.pop %v74
    %v78 = vmul.f32 %v77, 0.6931472
    %v79 = vsub.f32 0.0, %v76
    %v80 = vsub.f32 0.0, %v78
    %v81 = vadd.f32 %v67, %v79
    %v82 = vadd.f32 %v68, %v80
    %v83 = vmul.f32 %v81, 148.41316
    %v84 = vmul.f32 %v82, 148.41316
    %v85 = vsel %vm44, %v83, -inf
    %86 = vmax.xlane.f32.xlu0 %v85
    %v87 = vpop.xlane.xlu0 %86
    %v88 = vsel %vm44, %v84, -inf
    %89 = vmax.xlane.f32.xlu0 %v88
    %v90 = vpop.xlane.xlu0 %89
    %v91 = vsub.f32 %v83, %v87
    %v92 = vsub.f32 %v84, %v90
    %v93 = vmul.f32 %v91, 1.442695
    %v94 = vpow.pop %v93
    %v95 = vmul.f32 %v92, 1.442695
    %v96 = vpow.pop %v95
    %v97 = vsel %vm44, %v94, 0.0
    %98 = vadd.xlane.f32.xlu0 %v97
    %v99 = vpop.xlane.xlu0 %98
    %v100 = vsel %vm44, %v96, 0.0
    %101 = vadd.xlane.f32.xlu0 %v100
    %v102 = vpop.xlane.xlu0 %101
    %v103 = vrcp.pop %v99
    %v104 = vmul.f32 %v94, %v103
    %v105 = vrcp.pop %v102
    %v106 = vmul.f32 %v96, %v105
    %107 = vst.msk [vmem:[#allocation7] sm:$0xff] %vm44, %v104
    %108 = vst.msk [vmem:[#allocation7 + $0x8] sm:$0xff] %vm44, %v106
    // Predicated region
    $region18: #{tpu_custom_call.1} parent=1 // pred_check
      _
    $region19: #{tpu_custom_call.1} parent=1 // pred_check_branch
      %110 = sbr.rel (0) target = $region21
    $region20: #{tpu_custom_call.1} parent=1 // pred_region
      %s112 = ssub.s32 256, 256
      %113 = vsyncadd [#allocation4], %s112
      %s114 = sshll.u32 [#allocation7], 4
      %s115 = int_to_ptr.vmem [resolvable:$true] %s114
      %120 = dma.vmem_to_hbm [thread:$0]  %s115, 256, %s2, [#allocation4], 128, 128, 8
    $region21: #{tpu_custom_call.1} parent=1 // pred_fallthru
      _
    // Predicated region
    $region22: #{tpu_custom_call.1} parent=1 // pred_check
      _
    $region23: #{tpu_custom_call.1} parent=1 // pred_check_branch
      %122 = sbr.rel (0) target = $region25
    $region24: #{tpu_custom_call.1} parent=1 // pred_region
      %123 = dma.done [#allocation4], 256
    $region25: #{tpu_custom_call.1} parent=1 // pred_fallthru
      _
    %124 = vsyncpa [#allocation3], 1
    %125 = vsyncpa [#allocation6], 1
    %126 = vsyncpa [#allocation4], 1

</llo_original>
